<compile_context>
chip_gen: v7x
topology: tpu7x:2x2x1
jax: 0.10.0
libtpu: 0.0.40
codegen_flags: <defaults>
</compile_context>

<pallas_src>
import functools

import jax
import jax.numpy as jnp
import numpy as np
from jax.experimental import pallas as pl
from jax.experimental.pallas import tpu as pltpu

LANE = 128     # TPU vreg lane width – pad feature dims to this for lane-dense stores
SUBLANE = 8    # sublane granularity – pad batch to this


def _round_up(n, m):
    return ((n + m - 1) // m) * m


# ------------------------------- fused kernel -------------------------------


def _fused_residual_nn_kernel(*refs, num_blocks):
    """Entire ResidualNN forward on VMEM-resident tensors.

    refs = (x, w_fc1, b_fc1, [w1_i, b1_i, w2_i, b2_i]*num_blocks, w_fc2, b_fc2, out)
    All weights are [in, out] (pre-transposed), biases are [1, out], both padded
    to lane-dense widths with exact zeros.
    """
    x_ref = refs[0]
    w_fc1_ref, b_fc1_ref = refs[1], refs[2]
    blk_refs = refs[3 : 3 + 4 * num_blocks]
    w_fc2_ref, b_fc2_ref = refs[3 + 4 * num_blocks], refs[4 + 4 * num_blocks]
    o_ref = refs[5 + 4 * num_blocks]

    # o1 = relu(fc1(x))
    o = (
        jnp.dot(x_ref[...], w_fc1_ref[...], preferred_element_type=jnp.float32)
        + b_fc1_ref[...]
    )
    o = jnp.maximum(o, 0.0)

    # residual blocks: o = o + fc2(relu(fc1(o)))   (dropout = identity in eval)
    for i in range(num_blocks):
        w1 = blk_refs[4 * i][...]
        b1 = blk_refs[4 * i + 1][...]
        w2 = blk_refs[4 * i + 2][...]
        b2 = blk_refs[4 * i + 3][...]
        h = jnp.maximum(
            jnp.dot(o, w1, preferred_element_type=jnp.float32) + b1, 0.0
        )
        o = o + jnp.dot(h, w2, preferred_element_type=jnp.float32) + b2

    # o2 = relu(o);  o3 = fc2(o2)   (final relu folded into the kernel)
    o = jnp.maximum(o, 0.0)
    out = (
        jnp.dot(o, w_fc2_ref[...], preferred_element_type=jnp.float32)
        + b_fc2_ref[...]
    )
    o_ref[...] = out.astype(o_ref.dtype)


# ------------------------------- wrapper -------------------------------------


def residual_nn_forward(padded_params, x, output_size):
    """Fused forward. `x` is [batch, feature_size] (unpadded); returns
    [batch, output_size]."""
    m, _ = x.shape
    m_pad = _round_up(m, SUBLANE)
    if m_pad != m:
        x = jnp.pad(x, ((0, m_pad - m), (0, 0)))

    flat = []
    w, b = padded_params["fc1"]
    flat += [w, b]
    for (w1, b1, w2, b2) in padded_params["blocks"]:
        flat += [w1, b1, w2, b2]
    w_fc2, b_fc2 = padded_params["fc2"]
    flat += [w_fc2, b_fc2]

    n_pad = w_fc2.shape[1]
    num_blocks = len(padded_params["blocks"])

    # Advisory cost estimate for XLA's scheduler.
    flops = 2 * m_pad * sum(p.shape[0] * p.shape[1] for p in flat if p.ndim == 2 and p.shape[0] > 1)
    bytes_accessed = int(x.nbytes + sum(int(p.nbytes) for p in flat) + m_pad * n_pad * 4)

    kern = functools.partial(_fused_residual_nn_kernel, num_blocks=num_blocks)
    out = pl.pallas_call(
        kern,
        out_shape=jax.ShapeDtypeStruct((m_pad, n_pad), jnp.float32),
        cost_estimate=pl.CostEstimate(
            flops=flops, transcendentals=0, bytes_accessed=bytes_accessed
        ),
    )(x, *flat)

    # Slice away batch padding and the zero-padded output lanes.
    return out[:m, :output_size]


# ------------------------ parameter construction -----------------------------


def _init_linear(key, in_features, out_features, dtype=jnp.float32):
    """Deterministic init mimicking PyTorch nn.Linear default U(-1/sqrt(in), +)."""
    kw, kb = jax.random.split(key)
    bound = 1.0 / np.sqrt(in_features)
    # stored as [in, out] (transposed w.r.t. PyTorch's [out, in])
    w = jax.random.uniform(kw, (in_features, out_features), dtype, -bound, bound)
    b = jax.random.uniform(kb, (1, out_features), dtype, -bound, bound)
    return w, b


def make_residual_nn_params(key, feature_size, blocks, output_size):
    keys = jax.random.split(key, 2 + 2 * len(blocks))
    params = {}
    params["fc1"] = _init_linear(keys[0], feature_size, blocks[0][0])
    params["fc2"] = _init_linear(keys[1], blocks[-1][-2], output_size)
    params["blocks"] = []
    for i, (d_in, d_hid, d_out, _dropout) in enumerate(blocks):
        w1, b1 = _init_linear(keys[2 + 2 * i], d_in, d_hid)
        w2, b2 = _init_linear(keys[3 + 2 * i], d_hid, d_out)
        params["blocks"].append((w1, b1, w2, b2))
    return params


def _pad_linear(w, b, rows_pad, cols_pad):
    """Zero-pad a [in,out] weight and [1,out] bias to (rows_pad, cols_pad)."""
    w_p = jnp.pad(w, ((0, rows_pad - w.shape[0]), (0, cols_pad - w.shape[1])))
    b_p = jnp.pad(b, ((0, 0), (0, cols_pad - b.shape[1])))
    return w_p, b_p


def pad_residual_nn_params(params):
    """Lane-dense (128-padded) copies of the parameters.  Padding is with exact
    zeros so padded columns stay zero through relu / residual adds and the
    result sliced to the logical width is bit-identical."""
    padded = {}

    w, b = params["fc1"]
    # input features are NOT padded (x stays unpadded); pad only the output lanes
    padded["fc1"] = _pad_linear(w, b, w.shape[0], _round_up(w.shape[1], LANE))

    padded["blocks"] = []
    for (w1, b1, w2, b2) in params["blocks"]:
        w1p, b1p = _pad_linear(
            w1, b1, _round_up(w1.shape[0], LANE), _round_up(w1.shape[1], LANE)
        )
        w2p, b2p = _pad_linear(
            w2, b2, _round_up(w2.shape[0], LANE), _round_up(w2.shape[1], LANE)
        )
        padded["blocks"].append((w1p, b1p, w2p, b2p))

    w, b = params["fc2"]
    padded["fc2"] = _pad_linear(
        w, b, _round_up(w.shape[0], LANE), _round_up(w.shape[1], LANE)
    )
    return padded


# ------------------------------- reference -----------------------------------


def residual_nn_reference(params, x):
    """Pure-JAX reference (unpadded) for correctness checking."""
    w, b = params["fc1"]
    o = jnp.maximum(x @ w + b, 0.0)
    for (w1, b1, w2, b2) in params["blocks"]:
        h = jnp.maximum(o @ w1 + b1, 0.0)
        o = o + h @ w2 + b2
    o = jnp.maximum(o, 0.0)
    w, b = params["fc2"]
    return o @ w + b


# ----------------------------------- main -------------------------------------

if __name__ == "__main__":
    key = jax.random.PRNGKey(0)
    k_param, k_x = jax.random.split(key)

    feature_size = 32
    blocks = [(64, 48, 64, 0.1), (64, 48, 64, 0.1)]  # (in, hidden, out, dropout)
    output_size = 16
    batch = 8

    params = make_residual_nn_params(k_param, feature_size, blocks, output_size)
    padded_params = pad_residual_nn_params(params)
    x = jax.random.normal(k_x, (batch, feature_size), jnp.float32)

    out = residual_nn_forward(padded_params, x, output_size)
    out = jax.block_until_ready(out)

    ref = residual_nn_reference(params, x)
    assert out.shape == (batch, output_size)
    np.testing.assert_allclose(np.asarray(out), np.asarray(ref), rtol=1e-5, atol=1e-5)

    print("KERNEL_OK")
</pallas_src>

<mosaic_0001>
module attributes {stable_mosaic.version = 11 : i64} {
  func.func @_fused_residual_nn_kernel(%arg0: memref<8x32xf32, #tpu.memory_space<vmem>>, %arg1: memref<32x128xf32, #tpu.memory_space<vmem>>, %arg2: memref<1x128xf32, #tpu.memory_space<vmem>>, %arg3: memref<128x128xf32, #tpu.memory_space<vmem>>, %arg4: memref<1x128xf32, #tpu.memory_space<vmem>>, %arg5: memref<128x128xf32, #tpu.memory_space<vmem>>, %arg6: memref<1x128xf32, #tpu.memory_space<vmem>>, %arg7: memref<128x128xf32, #tpu.memory_space<vmem>>, %arg8: memref<1x128xf32, #tpu.memory_space<vmem>>, %arg9: memref<128x128xf32, #tpu.memory_space<vmem>>, %arg10: memref<1x128xf32, #tpu.memory_space<vmem>>, %arg11: memref<128x128xf32, #tpu.memory_space<vmem>>, %arg12: memref<1x128xf32, #tpu.memory_space<vmem>>, %arg13: memref<8x128xf32, #tpu.memory_space<vmem>>) attributes {dimension_semantics = [], scalar_prefetch = 0 : i64, scratch_operands = 0 : i64, tpu.core_type = #tpu.core_type<tc>} {
    %c0 = arith.constant 0 : index
    %c0_0 = arith.constant 0 : index
    %0 = vector.load %arg0[%c0, %c0_0] : memref<8x32xf32, #tpu.memory_space<vmem>>, vector<8x32xf32>
    %c0_1 = arith.constant 0 : index
    %c0_2 = arith.constant 0 : index
    %1 = vector.load %arg1[%c0_1, %c0_2] : memref<32x128xf32, #tpu.memory_space<vmem>>, vector<32x128xf32>
    %cst = arith.constant dense<0.000000e+00> : vector<8x128xf32>
    %2 = tpu.matmul %0, %1, %cst {dimension_numbers = #tpu.dot_dimension_numbers<[1], [0], [0], [1], [0, 0, 1, 1], [], []>} : vector<8x32xf32>, vector<32x128xf32>, vector<8x128xf32> -> vector<8x128xf32>
    %c0_3 = arith.constant 0 : index
    %c0_4 = arith.constant 0 : index
    %3 = vector.load %arg2[%c0_3, %c0_4] : memref<1x128xf32, #tpu.memory_space<vmem>>, vector<1x128xf32>
    %4 = vector.broadcast %3 : vector<1x128xf32> to vector<8x128xf32>
    %5 = arith.addf %2, %4 : vector<8x128xf32>
    %cst_5 = arith.constant 0.000000e+00 : f32
    %6 = vector.broadcast %cst_5 : f32 to vector<8x128xf32>
    %7 = arith.maximumf %5, %6 : vector<8x128xf32>
    %c0_6 = arith.constant 0 : index
    %c0_7 = arith.constant 0 : index
    %8 = vector.load %arg3[%c0_6, %c0_7] : memref<128x128xf32, #tpu.memory_space<vmem>>, vector<128x128xf32>
    %c0_8 = arith.constant 0 : index
    %c0_9 = arith.constant 0 : index
    %9 = vector.load %arg4[%c0_8, %c0_9] : memref<1x128xf32, #tpu.memory_space<vmem>>, vector<1x128xf32>
    %c0_10 = arith.constant 0 : index
    %c0_11 = arith.constant 0 : index
    %10 = vector.load %arg5[%c0_10, %c0_11] : memref<128x128xf32, #tpu.memory_space<vmem>>, vector<128x128xf32>
    %c0_12 = arith.constant 0 : index
    %c0_13 = arith.constant 0 : index
    %11 = vector.load %arg6[%c0_12, %c0_13] : memref<1x128xf32, #tpu.memory_space<vmem>>, vector<1x128xf32>
    %cst_14 = arith.constant dense<0.000000e+00> : vector<8x128xf32>
    %12 = tpu.matmul %7, %8, %cst_14 {dimension_numbers = #tpu.dot_dimension_numbers<[1], [0], [0], [1], [0, 0, 1, 1], [], []>} : vector<8x128xf32>, vector<128x128xf32>, vector<8x128xf32> -> vector<8x128xf32>
    %13 = vector.broadcast %9 : vector<1x128xf32> to vector<8x128xf32>
    %14 = arith.addf %12, %13 : vector<8x128xf32>
    %cst_15 = arith.constant 0.000000e+00 : f32
    %15 = vector.broadcast %cst_15 : f32 to vector<8x128xf32>
    %16 = arith.maximumf %14, %15 : vector<8x128xf32>
    %cst_16 = arith.constant dense<0.000000e+00> : vector<8x128xf32>
    %17 = tpu.matmul %16, %10, %cst_16 {dimension_numbers = #tpu.dot_dimension_numbers<[1], [0], [0], [1], [0, 0, 1, 1], [], []>} : vector<8x128xf32>, vector<128x128xf32>, vector<8x128xf32> -> vector<8x128xf32>
    %18 = arith.addf %7, %17 : vector<8x128xf32>
    %19 = vector.broadcast %11 : vector<1x128xf32> to vector<8x128xf32>
    %20 = arith.addf %18, %19 : vector<8x128xf32>
    %c0_17 = arith.constant 0 : index
    %c0_18 = arith.constant 0 : index
    %21 = vector.load %arg7[%c0_17, %c0_18] : memref<128x128xf32, #tpu.memory_space<vmem>>, vector<128x128xf32>
    %c0_19 = arith.constant 0 : index
    %c0_20 = arith.constant 0 : index
    %22 = vector.load %arg8[%c0_19, %c0_20] : memref<1x128xf32, #tpu.memory_space<vmem>>, vector<1x128xf32>
    %c0_21 = arith.constant 0 : index
    %c0_22 = arith.constant 0 : index
    %23 = vector.load %arg9[%c0_21, %c0_22] : memref<128x128xf32, #tpu.memory_space<vmem>>, vector<128x128xf32>
    %c0_23 = arith.constant 0 : index
    %c0_24 = arith.constant 0 : index
    %24 = vector.load %arg10[%c0_23, %c0_24] : memref<1x128xf32, #tpu.memory_space<vmem>>, vector<1x128xf32>
    %cst_25 = arith.constant dense<0.000000e+00> : vector<8x128xf32>
    %25 = tpu.matmul %20, %21, %cst_25 {dimension_numbers = #tpu.dot_dimension_numbers<[1], [0], [0], [1], [0, 0, 1, 1], [], []>} : vector<8x128xf32>, vector<128x128xf32>, vector<8x128xf32> -> vector<8x128xf32>
    %26 = vector.broadcast %22 : vector<1x128xf32> to vector<8x128xf32>
    %27 = arith.addf %25, %26 : vector<8x128xf32>
    %cst_26 = arith.constant 0.000000e+00 : f32
    %28 = vector.broadcast %cst_26 : f32 to vector<8x128xf32>
    %29 = arith.maximumf %27, %28 : vector<8x128xf32>
    %cst_27 = arith.constant dense<0.000000e+00> : vector<8x128xf32>
    %30 = tpu.matmul %29, %23, %cst_27 {dimension_numbers = #tpu.dot_dimension_numbers<[1], [0], [0], [1], [0, 0, 1, 1], [], []>} : vector<8x128xf32>, vector<128x128xf32>, vector<8x128xf32> -> vector<8x128xf32>
    %31 = arith.addf %20, %30 : vector<8x128xf32>
    %32 = vector.broadcast %24 : vector<1x128xf32> to vector<8x128xf32>
    %33 = arith.addf %31, %32 : vector<8x128xf32>
    %cst_28 = arith.constant 0.000000e+00 : f32
    %34 = vector.broadcast %cst_28 : f32 to vector<8x128xf32>
    %35 = arith.maximumf %33, %34 : vector<8x128xf32>
    %c0_29 = arith.constant 0 : index
    %c0_30 = arith.constant 0 : index
    %36 = vector.load %arg11[%c0_29, %c0_30] : memref<128x128xf32, #tpu.memory_space<vmem>>, vector<128x128xf32>
    %cst_31 = arith.constant dense<0.000000e+00> : vector<8x128xf32>
    %37 = tpu.matmul %35, %36, %cst_31 {dimension_numbers = #tpu.dot_dimension_numbers<[1], [0], [0], [1], [0, 0, 1, 1], [], []>} : vector<8x128xf32>, vector<128x128xf32>, vector<8x128xf32> -> vector<8x128xf32>
    %c0_32 = arith.constant 0 : index
    %c0_33 = arith.constant 0 : index
    %38 = vector.load %arg12[%c0_32, %c0_33] : memref<1x128xf32, #tpu.memory_space<vmem>>, vector<1x128xf32>
    %39 = vector.broadcast %38 : vector<1x128xf32> to vector<8x128xf32>
    %40 = arith.addf %37, %39 : vector<8x128xf32>
    %c0_34 = arith.constant 0 : index
    %c0_35 = arith.constant 0 : index
    %41 = vector.load %arg13[%c0_34, %c0_35] : memref<8x128xf32, #tpu.memory_space<vmem>>, vector<8x128xf32>
    tpu.vector_store %arg13[%c0_34, %c0_35], %40 {strides = array<i32>} : memref<8x128xf32, #tpu.memory_space<vmem>>, vector<8x128xf32>,
    return
  }
}

</mosaic_0001>

<llo_original>
// kernel: tpu_custom_call.1
$region0: #{tpu_custom_call.1}
  #allocation0 [shape = 'u32[]', space=smem, size = 0x4, offset = 0x4, fixed_abs, tag = 'smem constant byte address 0x4 - core index']
  #allocation1 [shape = 'u32[144,128]{1,0:T(1,128)}', space=vmem, size = 0x12000, scoped, tag = 'internal scratch']
  %s0 = inlined_call_operand.hbm [shape: f32[8,32], index: 0, kind: input, shape index: {}]
  %s1 = inlined_call_operand.hbm [shape: f32[32,128], index: 1, kind: input, shape index: {}]
  %s2 = inlined_call_operand.vmem [shape: f32[1,128], index: 2, kind: input, shape index: {}]
  %s3 = inlined_call_operand.hbm [shape: f32[128,128], index: 3, kind: input, shape index: {}]
  %s4 = inlined_call_operand.vmem [shape: f32[1,128], index: 4, kind: input, shape index: {}]
  %s5 = inlined_call_operand.hbm [shape: f32[128,128], index: 5, kind: input, shape index: {}]
  %s6 = inlined_call_operand.vmem [shape: f32[1,128], index: 6, kind: input, shape index: {}]
  %s7 = inlined_call_operand.hbm [shape: f32[128,128], index: 7, kind: input, shape index: {}]
  %s8 = inlined_call_operand.vmem [shape: f32[1,128], index: 8, kind: input, shape index: {}]
  %s9 = inlined_call_operand.hbm [shape: f32[128,128], index: 9, kind: input, shape index: {}]
  %s10 = inlined_call_operand.vmem [shape: f32[1,128], index: 10, kind: input, shape index: {}]
  %s11 = inlined_call_operand.hbm [shape: f32[128,128], index: 11, kind: input, shape index: {}]
  %s12 = inlined_call_operand.vmem [shape: f32[1,128], index: 12, kind: input, shape index: {}]
  %s13 = inlined_call_operand.hbm [shape: f32[8,128], index: 13, kind: output, shape index: {}]
  %s14 = sld [smem:[#allocation0]]
  $region90: #{tpu_custom_call.1} parent=0
    _
  %s16 = ssub.s32 1, %s14
  %s17 = scalar_select 0, %s16, %s14
  $region1: #{tpu_custom_call.1} parent=0
    #allocation2 [shape = 'u8[4096]{0}', space=vmem, size = 0x1000, scoped, tag = 'input window, operand 0, single buffered']
    #allocation3 [shape = 's32[1]{0}', space=sflag, size = 0x4, scoped, tag = 'scoped memory for tpu_custom_call.1']
    #allocation4 [shape = 's32[1]{0}', space=sflag, size = 0x4, scoped, tag = 'scoped memory for tpu_custom_call.1']
    #allocation5 [shape = 'u8[16384]{0}', space=vmem, size = 0x4000, scoped, tag = 'input window, operand 1, single buffered']
    #allocation6 [shape = 's32[1]{0}', space=sflag, size = 0x4, scoped, tag = 'scoped memory for tpu_custom_call.1']
    #allocation7 [shape = 'u8[65536]{0}', space=vmem, size = 0x10000, scoped, tag = 'input window, operand 3, single buffered']
    #allocation8 [shape = 'u8[65536]{0}', space=vmem, size = 0x10000, scoped, tag = 'input window, operand 5, single buffered']
    #allocation9 [shape = 's32[1]{0}', space=sflag, size = 0x4, scoped, tag = 'scoped memory for tpu_custom_call.1']
    #allocation10 [shape = 'u8[65536]{0}', space=vmem, size = 0x10000, scoped, tag = 'input window, operand 7, single buffered']
    #allocation11 [shape = 'u8[65536]{0}', space=vmem, size = 0x10000, scoped, tag = 'input window, operand 9, single buffered']
    #allocation12 [shape = 's32[1]{0}', space=sflag, size = 0x4, scoped, tag = 'scoped memory for tpu_custom_call.1']
    #allocation13 [shape = 'u8[65536]{0}', space=vmem, size = 0x10000, scoped, tag = 'input window, operand 11, single buffered']
    #allocation14 [shape = 'u8[4096]{0}', space=vmem, size = 0x1000, scoped, tag = 'output window, operand 0, single buffered']
    %18 = vsyncpa [#allocation3], 0
    %19 = vsyncpa [#allocation6], 0
    %20 = vsyncpa [#allocation9], 0
    %21 = vsyncpa [#allocation12], 0
    %22 = vsyncpa [#allocation4], 0
    // Predicated region
    $region2: #{tpu_custom_call.1} parent=1 // pred_check
      _
    $region3: #{tpu_custom_call.1} parent=1 // pred_check_branch
      %24 = sbr.rel (0) target = $region5
    $region4: #{tpu_custom_call.1} parent=1 // pred_region
      %s26 = ssub.s32 128, 128
      %27 = vsyncadd [#allocation3], %s26
      %s29 = sshll.u32 [#allocation2], 4
      %s30 = int_to_ptr.vmem [resolvable:$true] %s29
      %32 = dma.hbm_to_vmem [thread:$0]  %s0, 128, %s30, [#allocation3]
    $region5: #{tpu_custom_call.1} parent=1 // pred_fallthru
      _
    // Predicated region
    $region6: #{tpu_custom_call.1} parent=1 // pred_check
      _
    $region7: #{tpu_custom_call.1} parent=1 // pred_check_branch
      %34 = sbr.rel (0) target = $region9
    $region8: #{tpu_custom_call.1} parent=1 // pred_region
      %s36 = ssub.s32 512, 512
      %37 = vsyncadd [#allocation6], %s36
      %s38 = sshll.u32 [#allocation5], 4
      %s39 = int_to_ptr.vmem [resolvable:$true] %s38
      %44 = dma.hbm_to_vmem [thread:$0]  %s1, 512, %s39, [#allocation6], 128, 128, 8
    $region9: #{tpu_custom_call.1} parent=1 // pred_fallthru
      _
    // Predicated region
    $region10: #{tpu_custom_call.1} parent=1 // pred_check
      _
    $region11: #{tpu_custom_call.1} parent=1 // pred_check_branch
      %46 = sbr.rel (0) target = $region13
    $region12: #{tpu_custom_call.1} parent=1 // pred_region
      _
    $region13: #{tpu_custom_call.1} parent=1 // pred_fallthru
      _
    // Predicated region
    $region14: #{tpu_custom_call.1} parent=1 // pred_check
      _
    $region15: #{tpu_custom_call.1} parent=1 // pred_check_branch
      %48 = sbr.rel (0) target = $region17
    $region16: #{tpu_custom_call.1} parent=1 // pred_region
      %s50 = ssub.s32 2048, 2048
      %51 = vsyncadd [#allocation6], %s50
      %s52 = sshll.u32 [#allocation7], 4
      %s53 = int_to_ptr.vmem [resolvable:$true] %s52
      %58 = dma.hbm_to_vmem [thread:$0]  %s3, 2048, %s53, [#allocation6], 128, 128, 8
    $region17: #{tpu_custom_call.1} parent=1 // pred_fallthru
      _
    // Predicated region
    $region18: #{tpu_custom_call.1} parent=1 // pred_check
      _
    $region19: #{tpu_custom_call.1} parent=1 // pred_check_branch
      %60 = sbr.rel (0) target = $region21
    $region20: #{tpu_custom_call.1} parent=1 // pred_region
      _
    $region21: #{tpu_custom_call.1} parent=1 // pred_fallthru
      _
    // Predicated region
    $region22: #{tpu_custom_call.1} parent=1 // pred_check
      _
    $region23: #{tpu_custom_call.1} parent=1 // pred_check_branch
      %62 = sbr.rel (0) target = $region25
    $region24: #{tpu_custom_call.1} parent=1 // pred_region
      %s64 = ssub.s32 2048, 2048
      %65 = vsyncadd [#allocation9], %s64
      %s66 = sshll.u32 [#allocation8], 4
      %s67 = int_to_ptr.vmem [resolvable:$true] %s66
      %72 = dma.hbm_to_vmem [thread:$0]  %s5, 2048, %s67, [#allocation9], 128, 128, 8
    $region25: #{tpu_custom_call.1} parent=1 // pred_fallthru
      _
    // Predicated region
    $region26: #{tpu_custom_call.1} parent=1 // pred_check
      _
    $region27: #{tpu_custom_call.1} parent=1 // pred_check_branch
      %74 = sbr.rel (0) target = $region29
    $region28: #{tpu_custom_call.1} parent=1 // pred_region
      _
    $region29: #{tpu_custom_call.1} parent=1 // pred_fallthru
      _
    // Predicated region
    $region30: #{tpu_custom_call.1} parent=1 // pred_check
      _
    $region31: #{tpu_custom_call.1} parent=1 // pred_check_branch
      %76 = sbr.rel (0) target = $region33
    $region32: #{tpu_custom_call.1} parent=1 // pred_region
      %s78 = ssub.s32 2048, 2048
      %79 = vsyncadd [#allocation9], %s78
      %s80 = sshll.u32 [#allocation10], 4
      %s81 = int_to_ptr.vmem [resolvable:$true] %s80
      %86 = dma.hbm_to_vmem [thread:$0]  %s7, 2048, %s81, [#allocation9], 128, 128, 8
    $region33: #{tpu_custom_call.1} parent=1 // pred_fallthru
      _
    // Predicated region
    $region34: #{tpu_custom_call.1} parent=1 // pred_check
      _
    $region35: #{tpu_custom_call.1} parent=1 // pred_check_branch
      %88 = sbr.rel (0) target = $region37
    $region36: #{tpu_custom_call.1} parent=1 // pred_region
      _
    $region37: #{tpu_custom_call.1} parent=1 // pred_fallthru
      _
    // Predicated region
    $region38: #{tpu_custom_call.1} parent=1 // pred_check
      _
    $region39: #{tpu_custom_call.1} parent=1 // pred_check_branch
      %90 = sbr.rel (0) target = $region41
    $region40: #{tpu_custom_call.1} parent=1 // pred_region
      %s92 = ssub.s32 2048, 2048
      %93 = vsyncadd [#allocation12], %s92
      %s94 = sshll.u32 [#allocation11], 4
      %s95 = int_to_ptr.vmem [resolvable:$true] %s94
      %100 = dma.hbm_to_vmem [thread:$0]  %s9, 2048, %s95, [#allocation12], 128, 128, 8
    $region41: #{tpu_custom_call.1} parent=1 // pred_fallthru
      _
    // Predicated region
    $region42: #{tpu_custom_call.1} parent=1 // pred_check
      _
    $region43: #{tpu_custom_call.1} parent=1 // pred_check_branch
      %102 = sbr.rel (0) target = $region45
    $region44: #{tpu_custom_call.1} parent=1 // pred_region
      _
    $region45: #{tpu_custom_call.1} parent=1 // pred_fallthru
      _
    // Predicated region
    $region46: #{tpu_custom_call.1} parent=1 // pred_check
      _
    $region47: #{tpu_custom_call.1} parent=1 // pred_check_branch
      %104 = sbr.rel (0) target = $region49
    $region48: #{tpu_custom_call.1} parent=1 // pred_region
      %s106 = ssub.s32 2048, 2048
      %107 = vsyncadd [#allocation12], %s106
      %s108 = sshll.u32 [#allocation13], 4
      %s109 = int_to_ptr.vmem [resolvable:$true] %s108
      %114 = dma.hbm_to_vmem [thread:$0]  %s11, 2048, %s109, [#allocation12], 128, 128, 8
    $region49: #{tpu_custom_call.1} parent=1 // pred_fallthru
      _
    // Predicated region
    $region50: #{tpu_custom_call.1} parent=1 // pred_check
      _
    $region51: #{tpu_custom_call.1} parent=1 // pred_check_branch
      %116 = sbr.rel (0) target = $region53
    $region52: #{tpu_custom_call.1} parent=1 // pred_region
      _
    $region53: #{tpu_custom_call.1} parent=1 // pred_fallthru
      _
    // Predicated region
    $region54: #{tpu_custom_call.1} parent=1 // pred_check
      _
    $region55: #{tpu_custom_call.1} parent=1 // pred_check_branch
      %118 = sbr.rel (0) target = $region57
    $region56: #{tpu_custom_call.1} parent=1 // pred_region
      %119 = dma.done [#allocation3], 128
    $region57: #{tpu_custom_call.1} parent=1 // pred_fallthru
      _
    // Predicated region
    $region58: #{tpu_custom_call.1} parent=1 // pred_check
      _
    $region59: #{tpu_custom_call.1} parent=1 // pred_check_branch
      %121 = sbr.rel (0) target = $region61
    $region60: #{tpu_custom_call.1} parent=1 // pred_region
      %122 = dma.done [#allocation6], 512
    $region61: #{tpu_custom_call.1} parent=1 // pred_fallthru
      _
    // Predicated region
    $region62: #{tpu_custom_call.1} parent=1 // pred_check
      _
    $region63: #{tpu_custom_call.1} parent=1 // pred_check_branch
      %124 = sbr.rel (0) target = $region65
    $region64: #{tpu_custom_call.1} parent=1 // pred_region
      %125 = dma.done [#allocation6], 2048
    $region65: #{tpu_custom_call.1} parent=1 // pred_fallthru
      _
    // Predicated region
    $region66: #{tpu_custom_call.1} parent=1 // pred_check
      _
    $region67: #{tpu_custom_call.1} parent=1 // pred_check_branch
      %127 = sbr.rel (0) target = $region69
    $region68: #{tpu_custom_call.1} parent=1 // pred_region
      %128 = dma.done [#allocation9], 2048
    $region69: #{tpu_custom_call.1} parent=1 // pred_fallthru
      _
    // Predicated region
    $region70: #{tpu_custom_call.1} parent=1 // pred_check
      _
    $region71: #{tpu_custom_call.1} parent=1 // pred_check_branch
      %130 = sbr.rel (0) target = $region73
    $region72: #{tpu_custom_call.1} parent=1 // pred_region
      %131 = dma.done [#allocation9], 2048
    $region73: #{tpu_custom_call.1} parent=1 // pred_fallthru
      _
    // Predicated region
    $region74: #{tpu_custom_call.1} parent=1 // pred_check
      _
    $region75: #{tpu_custom_call.1} parent=1 // pred_check_branch
      %133 = sbr.rel (0) target = $region77
    $region76: #{tpu_custom_call.1} parent=1 // pred_region
      %134 = dma.done [#allocation12], 2048
    $region77: #{tpu_custom_call.1} parent=1 // pred_fallthru
      _
    // Predicated region
    $region78: #{tpu_custom_call.1} parent=1 // pred_check
      _
    $region79: #{tpu_custom_call.1} parent=1 // pred_check_branch
      %136 = sbr.rel (0) target = $region81
    $region80: #{tpu_custom_call.1} parent=1 // pred_region
      %137 = dma.done [#allocation12], 2048
    $region81: #{tpu_custom_call.1} parent=1 // pred_fallthru
      _
    %v138 = vld [vmem:[#allocation2] sm:$0xff]
    %v139 = vld [vmem:[#allocation5] sm:$0xff]
    %v140 = vld [vmem:[#allocation5 + $0x8] sm:$0xff]
    %v141 = vld [vmem:[#allocation5 + $0x10] sm:$0xff]
    %v142 = vld [vmem:[#allocation5 + $0x18] sm:$0xff]
    %v143 = vld [vmem:[%s2] sm:$0x1]
    %v145 = vlaneseq
    %v146 = vshrl.u32 %v145, 7
    %v147 = vsub.s32 0, %v146
    %v148 = vrot.slane %v143, %v147
    %vm150 = vcmask 261120
    %v152 = vsel %vm150, %v138, 0
    %154 = vmatprep.subr.mxu0 0.0
    %155 = vmatpush1.msra.mxu0 %v139
    %156 = vmatprep.subr.mxu0 0.0
    %157 = vmatpush1.msra.mxu0 %v140
    %158 = vmatprep.subr.mxu0 0.0
    %159 = vmatpush1.msra.mxu0 %v141
    %160 = vmatprep.subr.mxu0 0.0
    %161 = vmatpush1.msra.mxu0 %v142
    %162 = vmatprep.subr.mxu0 0.0
    %163 = vmatpush1.msra.mxu0 0.0
    %164 = vmatprep.subr.mxu0 0.0
    %165 = vmatpush1.msra.mxu0 0.0
    %166 = vmatprep.subr.mxu0 0.0
    %167 = vmatpush1.msra.mxu0 0.0
    %168 = vmatprep.subr.mxu0 0.0
    %169 = vmatpush1.msra.mxu0 0.0
    %170 = vmatprep.subr.mxu0 0.0
    %171 = vmatpush1.msra.mxu0 0.0
    %172 = vmatprep.subr.mxu0 0.0
    %173 = vmatpush1.msra.mxu0 0.0
    %174 = vmatprep.subr.mxu0 0.0
    %175 = vmatpush1.msra.mxu0 0.0
    %176 = vmatprep.subr.mxu0 0.0
    %177 = vmatpush1.msra.mxu0 0.0
    %178 = vmatprep.subr.mxu0 0.0
    %179 = vmatpush1.msra.mxu0 0.0
    %180 = vmatprep.subr.mxu0 0.0
    %181 = vmatpush1.msra.mxu0 0.0
    %182 = vmatprep.subr.mxu0 0.0
    %183 = vmatpush1.msra.mxu0 0.0
    %184 = vmatprep.subr.mxu0 0.0
    %185 = vmatpush1.msra.mxu0 0.0
    %186 = vmatprep.subr.mxu0 0.0
    %187 = vmatpush1.msra.mxu0 0.0
    %188 = vmatprep.subr.mxu0 0.0
    %189 = vmatpush1.msra.mxu0 0.0
    %190 = vmatprep.subr.mxu0 0.0
    %191 = vmatpush1.msra.mxu0 0.0
    %192 = vmatprep.subr.mxu0 0.0
    %193 = vmatpush1.msra.mxu0 0.0
    %194 = vmatprep.subr.mxu0 0.0
    %195 = vmatpush1.msra.mxu0 0.0
    %196 = vmatprep.subr.mxu0 0.0
    %197 = vmatpush1.msra.mxu0 0.0
    %198 = vmatprep.subr.mxu0 0.0
    %199 = vmatpush1.msra.mxu0 0.0
    %200 = vmatprep.subr.mxu0 0.0
    %201 = vmatpush1.msra.mxu0 0.0
    %202 = vmatprep.subr.mxu0 0.0
    %203 = vmatpush1.msra.mxu0 0.0
    %204 = vmatprep.subr.mxu0 0.0
    %205 = vmatpush1.msra.mxu0 0.0
    %206 = vmatprep.subr.mxu0 0.0
    %207 = vmatpush1.msra.mxu0 0.0
    %208 = vmatprep.subr.mxu0 0.0
    %209 = vmatpush1.msra.mxu0 0.0
    %210 = vmatprep.subr.mxu0 0.0
    %211 = vmatpush1.msra.mxu0 0.0
    %212 = vmatprep.subr.mxu0 0.0
    %213 = vmatpush1.msra.mxu0 0.0
    %214 = vmatprep.subr.mxu0 0.0
    %215 = vmatpush1.msra.mxu0 0.0
    %216 = vmatprep.subr.mxu0 0.0
    %217 = vmatpush1.msra.mxu0 0.0
    %218 = vmatprep.mubr.f32.mxu0 0.0
    %219 = vmatmul.mubr.f32.gmra.mrb[0].mxu0 %v152
    %v220 = vpop.f32.mrb[0].mxu0
    %v221 = vadd.f32 %v148, %v220
    %v222 = vpop.f32.mrb[0].mxu0
    %223 = vdwg.mxu0
    %v224 = vmax.f32 %v221, 0.0
    %v225 = vld [vmem:[#allocation7] sm:$0xff]
    %v226 = vld [vmem:[#allocation7 + $0x8] sm:$0xff]
    %v227 = vld [vmem:[#allocation7 + $0x10] sm:$0xff]
    %v228 = vld [vmem:[#allocation7 + $0x18] sm:$0xff]
    %v229 = vld [vmem:[#allocation7 + $0x20] sm:$0xff]
    %v230 = vld [vmem:[#allocation7 + $0x28] sm:$0xff]
    %v231 = vld [vmem:[#allocation7 + $0x30] sm:$0xff]
    %v232 = vld [vmem:[#allocation7 + $0x38] sm:$0xff]
    %v233 = vld [vmem:[#allocation7 + $0x40] sm:$0xff]
    %v234 = vld [vmem:[#allocation7 + $0x48] sm:$0xff]
    %v235 = vld [vmem:[#allocation7 + $0x50] sm:$0xff]
    %v236 = vld [vmem:[#allocation7 + $0x58] sm:$0xff]
    %v237 = vld [vmem:[#allocation7 + $0x60] sm:$0xff]
    %v238 = vld [vmem:[#allocation7 + $0x68] sm:$0xff]
    %v239 = vld [vmem:[#allocation7 + $0x70] sm:$0xff]
    %v240 = vld [vmem:[#allocation7 + $0x78] sm:$0xff]
    %v241 = vld [vmem:[%s4] sm:$0x1]
    %v242 = vld [vmem:[#allocation8] sm:$0xff]
    %v243 = vld [vmem:[#allocation8 + $0x8] sm:$0xff]
    %v244 = vld [vmem:[#allocation8 + $0x10] sm:$0xff]
    %v245 = vld [vmem:[#allocation8 + $0x18] sm:$0xff]
    %v246 = vld [vmem:[#allocation8 + $0x20] sm:$0xff]
    %v247 = vld [vmem:[#allocation8 + $0x28] sm:$0xff]
    %v248 = vld [vmem:[#allocation8 + $0x30] sm:$0xff]
    %v249 = vld [vmem:[#allocation8 + $0x38] sm:$0xff]
    %v250 = vld [vmem:[#allocation8 + $0x40] sm:$0xff]
    %v251 = vld [vmem:[#allocation8 + $0x48] sm:$0xff]
    %v252 = vld [vmem:[#allocation8 + $0x50] sm:$0xff]
    %v253 = vld [vmem:[#allocation8 + $0x58] sm:$0xff]
    %v254 = vld [vmem:[#allocation8 + $0x60] sm:$0xff]
    %v255 = vld [vmem:[#allocation8 + $0x68] sm:$0xff]
    %v256 = vld [vmem:[#allocation8 + $0x70] sm:$0xff]
    %v257 = vld [vmem:[#allocation8 + $0x78] sm:$0xff]
    %v258 = vld [vmem:[%s6] sm:$0x1]
    %v260 = vlaneseq
    %v261 = vshrl.u32 %v260, 7
    %v262 = vsub.s32 0, %v261
    %v263 = vrot.slane %v241, %v262
    %265 = vmatprep.subr.mxu0 0.0
    %266 = vmatpush1.msra.mxu0 %v225
    %267 = vmatprep.subr.mxu0 0.0
    %268 = vmatpush1.msra.mxu0 %v226
    %269 = vmatprep.subr.mxu0 0.0
    %270 = vmatpush1.msra.mxu0 %v227
    %271 = vmatprep.subr.mxu0 0.0
    %272 = vmatpush1.msra.mxu0 %v228
    %273 = vmatprep.subr.mxu0 0.0
    %274 = vmatpush1.msra.mxu0 %v229
    %275 = vmatprep.subr.mxu0 0.0
    %276 = vmatpush1.msra.mxu0 %v230
    %277 = vmatprep.subr.mxu0 0.0
    %278 = vmatpush1.msra.mxu0 %v231
    %279 = vmatprep.subr.mxu0 0.0
    %280 = vmatpush1.msra.mxu0 %v232
    %281 = vmatprep.subr.mxu0 0.0
    %282 = vmatpush1.msra.mxu0 %v233
    %283 = vmatprep.subr.mxu0 0.0
    %284 = vmatpush1.msra.mxu0 %v234
    %285 = vmatprep.subr.mxu0 0.0
    %286 = vmatpush1.msra.mxu0 %v235
    %287 = vmatprep.subr.mxu0 0.0
    %288 = vmatpush1.msra.mxu0 %v236
    %289 = vmatprep.subr.mxu0 0.0
    %290 = vmatpush1.msra.mxu0 %v237
    %291 = vmatprep.subr.mxu0 0.0
    %292 = vmatpush1.msra.mxu0 %v238
    %293 = vmatprep.subr.mxu0 0.0
    %294 = vmatpush1.msra.mxu0 %v239
    %295 = vmatprep.subr.mxu0 0.0
    %296 = vmatpush1.msra.mxu0 %v240
    %297 = vmatprep.subr.mxu0 0.0
    %298 = vmatpush1.msra.mxu0 0.0
    %299 = vmatprep.subr.mxu0 0.0
    %300 = vmatpush1.msra.mxu0 0.0
    %301 = vmatprep.subr.mxu0 0.0
    %302 = vmatpush1.msra.mxu0 0.0
    %303 = vmatprep.subr.mxu0 0.0
    %304 = vmatpush1.msra.mxu0 0.0
    %305 = vmatprep.subr.mxu0 0.0
    %306 = vmatpush1.msra.mxu0 0.0
    %307 = vmatprep.subr.mxu0 0.0
    %308 = vmatpush1.msra.mxu0 0.0
    %309 = vmatprep.subr.mxu0 0.0
    %310 = vmatpush1.msra.mxu0 0.0
    %311 = vmatprep.subr.mxu0 0.0
    %312 = vmatpush1.msra.mxu0 0.0
    %313 = vmatprep.subr.mxu0 0.0
    %314 = vmatpush1.msra.mxu0 0.0
    %315 = vmatprep.subr.mxu0 0.0
    %316 = vmatpush1.msra.mxu0 0.0
    %317 = vmatprep.subr.mxu0 0.0
    %318 = vmatpush1.msra.mxu0 0.0
    %319 = vmatprep.subr.mxu0 0.0
    %320 = vmatpush1.msra.mxu0 0.0
    %321 = vmatprep.subr.mxu0 0.0
    %322 = vmatpush1.msra.mxu0 0.0
    %323 = vmatprep.subr.mxu0 0.0
    %324 = vmatpush1.msra.mxu0 0.0
    %325 = vmatprep.subr.mxu0 0.0
    %326 = vmatpush1.msra.mxu0 0.0
    %327 = vmatprep.subr.mxu0 0.0
    %328 = vmatpush1.msra.mxu0 0.0
    %329 = vmatprep.mubr.f32.mxu0 0.0
    %330 = vmatmul.mubr.f32.gmra.mrb[0].mxu0 %v224
    %v331 = vpop.f32.mrb[0].mxu0
    %v332 = vadd.f32 %v263, %v331
    %v333 = vpop.f32.mrb[0].mxu0
    %334 = vdwg.mxu0
    %v335 = vmax.f32 %v332, 0.0
    %336 = vmatprep.subr.mxu0 0.0
    %337 = vmatpush1.msra.mxu0 %v242
    %338 = vmatprep.subr.mxu0 0.0
    %339 = vmatpush1.msra.mxu0 %v243
    %340 = vmatprep.subr.mxu0 0.0
    %341 = vmatpush1.msra.mxu0 %v244
    %342 = vmatprep.subr.mxu0 0.0
    %343 = vmatpush1.msra.mxu0 %v245
    %344 = vmatprep.subr.mxu0 0.0
    %345 = vmatpush1.msra.mxu0 %v246
    %346 = vmatprep.subr.mxu0 0.0
    %347 = vmatpush1.msra.mxu0 %v247
    %348 = vmatprep.subr.mxu0 0.0
    %349 = vmatpush1.msra.mxu0 %v248
    %350 = vmatprep.subr.mxu0 0.0
    %351 = vmatpush1.msra.mxu0 %v249
    %352 = vmatprep.subr.mxu0 0.0
    %353 = vmatpush1.msra.mxu0 %v250
    %354 = vmatprep.subr.mxu0 0.0
    %355 = vmatpush1.msra.mxu0 %v251
    %356 = vmatprep.subr.mxu0 0.0
    %357 = vmatpush1.msra.mxu0 %v252
    %358 = vmatprep.subr.mxu0 0.0
    %359 = vmatpush1.msra.mxu0 %v253
    %360 = vmatprep.subr.mxu0 0.0
    %361 = vmatpush1.msra.mxu0 %v254
    %362 = vmatprep.subr.mxu0 0.0
    %363 = vmatpush1.msra.mxu0 %v255
    %364 = vmatprep.subr.mxu0 0.0
    %365 = vmatpush1.msra.mxu0 %v256
    %366 = vmatprep.subr.mxu0 0.0
    %367 = vmatpush1.msra.mxu0 %v257
    %368 = vmatprep.subr.mxu0 0.0
    %369 = vmatpush1.msra.mxu0 0.0
    %370 = vmatprep.subr.mxu0 0.0
    %371 = vmatpush1.msra.mxu0 0.0
    %372 = vmatprep.subr.mxu0 0.0
    %373 = vmatpush1.msra.mxu0 0.0
    %374 = vmatprep.subr.mxu0 0.0
    %375 = vmatpush1.msra.mxu0 0.0
    %376 = vmatprep.subr.mxu0 0.0
    %377 = vmatpush1.msra.mxu0 0.0
    %378 = vmatprep.subr.mxu0 0.0
    %379 = vmatpush1.msra.mxu0 0.0
    %380 = vmatprep.subr.mxu0 0.0
    %381 = vmatpush1.msra.mxu0 0.0
    %382 = vmatprep.subr.mxu0 0.0
    %383 = vmatpush1.msra.mxu0 0.0
    %384 = vmatprep.subr.mxu0 0.0
    %385 = vmatpush1.msra.mxu0 0.0
    %386 = vmatprep.subr.mxu0 0.0
    %387 = vmatpush1.msra.mxu0 0.0
    %388 = vmatprep.subr.mxu0 0.0
    %389 = vmatpush1.msra.mxu0 0.0
    %390 = vmatprep.subr.mxu0 0.0
    %391 = vmatpush1.msra.mxu0 0.0
    %392 = vmatprep.subr.mxu0 0.0
    %393 = vmatpush1.msra.mxu0 0.0
    %394 = vmatprep.subr.mxu0 0.0
    %395 = vmatpush1.msra.mxu0 0.0
    %396 = vmatprep.subr.mxu0 0.0
    %397 = vmatpush1.msra.mxu0 0.0
    %398 = vmatprep.subr.mxu0 0.0
    %399 = vmatpush1.msra.mxu0 0.0
    %400 = vmatprep.mubr.f32.mxu0 0.0
    %401 = vmatmul.mubr.f32.gmra.mrb[0].mxu0 %v335
    %v402 = vpop.f32.mrb[0].mxu0
    %v403 = vadd.f32 0.0, %v402
    %v404 = vpop.f32.mrb[0].mxu0
    %405 = vdwg.mxu0
    %v406 = vadd.f32 %v224, %v403
    %v408 = vlaneseq
    %v409 = vshrl.u32 %v408, 7
    %v410 = vsub.s32 0, %v409
    %v411 = vrot.slane %v258, %v410
    %v413 = vadd.f32 %v406, %v411
    %v414 = vld [vmem:[#allocation10] sm:$0xff]
    %v415 = vld [vmem:[#allocation10 + $0x8] sm:$0xff]
    %v416 = vld [vmem:[#allocation10 + $0x10] sm:$0xff]
    %v417 = vld [vmem:[#allocation10 + $0x18] sm:$0xff]
    %v418 = vld [vmem:[#allocation10 + $0x20] sm:$0xff]
    %v419 = vld [vmem:[#allocation10 + $0x28] sm:$0xff]
    %v420 = vld [vmem:[#allocation10 + $0x30] sm:$0xff]
    %v421 = vld [vmem:[#allocation10 + $0x38] sm:$0xff]
    %v422 = vld [vmem:[#allocation10 + $0x40] sm:$0xff]
    %v423 = vld [vmem:[#allocation10 + $0x48] sm:$0xff]
    %v424 = vld [vmem:[#allocation10 + $0x50] sm:$0xff]
    %v425 = vld [vmem:[#allocation10 + $0x58] sm:$0xff]
    %v426 = vld [vmem:[#allocation10 + $0x60] sm:$0xff]
    %v427 = vld [vmem:[#allocation10 + $0x68] sm:$0xff]
    %v428 = vld [vmem:[#allocation10 + $0x70] sm:$0xff]
    %v429 = vld [vmem:[#allocation10 + $0x78] sm:$0xff]
    %v430 = vld [vmem:[%s8] sm:$0x1]
    %v431 = vld [vmem:[#allocation11] sm:$0xff]
    %v432 = vld [vmem:[#allocation11 + $0x8] sm:$0xff]
    %v433 = vld [vmem:[#allocation11 + $0x10] sm:$0xff]
    %v434 = vld [vmem:[#allocation11 + $0x18] sm:$0xff]
    %v435 = vld [vmem:[#allocation11 + $0x20] sm:$0xff]
    %v436 = vld [vmem:[#allocation11 + $0x28] sm:$0xff]
    %v437 = vld [vmem:[#allocation11 + $0x30] sm:$0xff]
    %v438 = vld [vmem:[#allocation11 + $0x38] sm:$0xff]
    %v439 = vld [vmem:[#allocation11 + $0x40] sm:$0xff]
    %v440 = vld [vmem:[#allocation11 + $0x48] sm:$0xff]
    %v441 = vld [vmem:[#allocation11 + $0x50] sm:$0xff]
    %v442 = vld [vmem:[#allocation11 + $0x58] sm:$0xff]
    %v443 = vld [vmem:[#allocation11 + $0x60] sm:$0xff]
    %v444 = vld [vmem:[#allocation11 + $0x68] sm:$0xff]
    %v445 = vld [vmem:[#allocation11 + $0x70] sm:$0xff]
    %v446 = vld [vmem:[#allocation11 + $0x78] sm:$0xff]
    %v447 = vld [vmem:[%s10] sm:$0x1]
    %v449 = vlaneseq
    %v450 = vshrl.u32 %v449, 7
    %v451 = vsub.s32 0, %v450
    %v452 = vrot.slane %v430, %v451
    %454 = vmatprep.subr.mxu0 0.0
    %455 = vmatpush1.msra.mxu0 %v414
    %456 = vmatprep.subr.mxu0 0.0
    %457 = vmatpush1.msra.mxu0 %v415
    %458 = vmatprep.subr.mxu0 0.0
    %459 = vmatpush1.msra.mxu0 %v416
    %460 = vmatprep.subr.mxu0 0.0
    %461 = vmatpush1.msra.mxu0 %v417
    %462 = vmatprep.subr.mxu0 0.0
    %463 = vmatpush1.msra.mxu0 %v418
    %464 = vmatprep.subr.mxu0 0.0
    %465 = vmatpush1.msra.mxu0 %v419
    %466 = vmatprep.subr.mxu0 0.0
    %467 = vmatpush1.msra.mxu0 %v420
    %468 = vmatprep.subr.mxu0 0.0
    %469 = vmatpush1.msra.mxu0 %v421
    %470 = vmatprep.subr.mxu0 0.0
    %471 = vmatpush1.msra.mxu0 %v422
    %472 = vmatprep.subr.mxu0 0.0
    %473 = vmatpush1.msra.mxu0 %v423
    %474 = vmatprep.subr.mxu0 0.0
    %475 = vmatpush1.msra.mxu0 %v424
    %476 = vmatprep.subr.mxu0 0.0
    %477 = vmatpush1.msra.mxu0 %v425
    %478 = vmatprep.subr.mxu0 0.0
    %479 = vmatpush1.msra.mxu0 %v426
    %480 = vmatprep.subr.mxu0 0.0
    %481 = vmatpush1.msra.mxu0 %v427
    %482 = vmatprep.subr.mxu0 0.0
    %483 = vmatpush1.msra.mxu0 %v428
    %484 = vmatprep.subr.mxu0 0.0
    %485 = vmatpush1.msra.mxu0 %v429
    %486 = vmatprep.subr.mxu0 0.0
    %487 = vmatpush1.msra.mxu0 0.0
    %488 = vmatprep.subr.mxu0 0.0
    %489 = vmatpush1.msra.mxu0 0.0
    %490 = vmatprep.subr.mxu0 0.0
    %491 = vmatpush1.msra.mxu0 0.0
    %492 = vmatprep.subr.mxu0 0.0
    %493 = vmatpush1.msra.mxu0 0.0
    %494 = vmatprep.subr.mxu0 0.0
    %495 = vmatpush1.msra.mxu0 0.0
    %496 = vmatprep.subr.mxu0 0.0
    %497 = vmatpush1.msra.mxu0 0.0
    %498 = vmatprep.subr.mxu0 0.0
    %499 = vmatpush1.msra.mxu0 0.0
    %500 = vmatprep.subr.mxu0 0.0
    %501 = vmatpush1.msra.mxu0 0.0
    %502 = vmatprep.subr.mxu0 0.0
    %503 = vmatpush1.msra.mxu0 0.0
    %504 = vmatprep.subr.mxu0 0.0
    %505 = vmatpush1.msra.mxu0 0.0
    %506 = vmatprep.subr.mxu0 0.0
    %507 = vmatpush1.msra.mxu0 0.0
    %508 = vmatprep.subr.mxu0 0.0
    %509 = vmatpush1.msra.mxu0 0.0
    %510 = vmatprep.subr.mxu0 0.0
    %511 = vmatpush1.msra.mxu0 0.0
    %512 = vmatprep.subr.mxu0 0.0
    %513 = vmatpush1.msra.mxu0 0.0
    %514 = vmatprep.subr.mxu0 0.0
    %515 = vmatpush1.msra.mxu0 0.0
    %516 = vmatprep.subr.mxu0 0.0
    %517 = vmatpush1.msra.mxu0 0.0
    %518 = vmatprep.mubr.f32.mxu0 0.0
    %519 = vmatmul.mubr.f32.gmra.mrb[0].mxu0 %v413
    %v520 = vpop.f32.mrb[0].mxu0
    %v521 = vadd.f32 %v452, %v520
    %v522 = vpop.f32.mrb[0].mxu0
    %523 = vdwg.mxu0
    %v524 = vmax.f32 %v521, 0.0
    %525 = vmatprep.subr.mxu0 0.0
    %526 = vmatpush1.msra.mxu0 %v431
    %527 = vmatprep.subr.mxu0 0.0
    %528 = vmatpush1.msra.mxu0 %v432
    %529 = vmatprep.subr.mxu0 0.0
    %530 = vmatpush1.msra.mxu0 %v433
    %531 = vmatprep.subr.mxu0 0.0
    %532 = vmatpush1.msra.mxu0 %v434
    %533 = vmatprep.subr.mxu0 0.0
    %534 = vmatpush1.msra.mxu0 %v435
    %535 = vmatprep.subr.mxu0 0.0
    %536 = vmatpush1.msra.mxu0 %v436
    %537 = vmatprep.subr.mxu0 0.0
    %538 = vmatpush1.msra.mxu0 %v437
    %539 = vmatprep.subr.mxu0 0.0
    %540 = vmatpush1.msra.mxu0 %v438
    %541 = vmatprep.subr.mxu0 0.0
    %542 = vmatpush1.msra.mxu0 %v439
    %543 = vmatprep.subr.mxu0 0.0
    %544 = vmatpush1.msra.mxu0 %v440
    %545 = vmatprep.subr.mxu0 0.0
    %546 = vmatpush1.msra.mxu0 %v441
    %547 = vmatprep.subr.mxu0 0.0
    %548 = vmatpush1.msra.mxu0 %v442
    %549 = vmatprep.subr.mxu0 0.0
    %550 = vmatpush1.msra.mxu0 %v443
    %551 = vmatprep.subr.mxu0 0.0
    %552 = vmatpush1.msra.mxu0 %v444
    %553 = vmatprep.subr.mxu0 0.0
    %554 = vmatpush1.msra.mxu0 %v445
    %555 = vmatprep.subr.mxu0 0.0
    %556 = vmatpush1.msra.mxu0 %v446
    %557 = vmatprep.subr.mxu0 0.0
    %558 = vmatpush1.msra.mxu0 0.0
    %559 = vmatprep.subr.mxu0 0.0
    %560 = vmatpush1.msra.mxu0 0.0
    %561 = vmatprep.subr.mxu0 0.0
    %562 = vmatpush1.msra.mxu0 0.0
    %563 = vmatprep.subr.mxu0 0.0
    %564 = vmatpush1.msra.mxu0 0.0
    %565 = vmatprep.subr.mxu0 0.0
    %566 = vmatpush1.msra.mxu0 0.0
    %567 = vmatprep.subr.mxu0 0.0
    %568 = vmatpush1.msra.mxu0 0.0
    %569 = vmatprep.subr.mxu0 0.0
    %570 = vmatpush1.msra.mxu0 0.0
    %571 = vmatprep.subr.mxu0 0.0
    %572 = vmatpush1.msra.mxu0 0.0
    %573 = vmatprep.subr.mxu0 0.0
    %574 = vmatpush1.msra.mxu0 0.0
    %575 = vmatprep.subr.mxu0 0.0
    %576 = vmatpush1.msra.mxu0 0.0
    %577 = vmatprep.subr.mxu0 0.0
    %578 = vmatpush1.msra.mxu0 0.0
    %579 = vmatprep.subr.mxu0 0.0
    %580 = vmatpush1.msra.mxu0 0.0
    %581 = vmatprep.subr.mxu0 0.0
    %582 = vmatpush1.msra.mxu0 0.0
    %583 = vmatprep.subr.mxu0 0.0
    %584 = vmatpush1.msra.mxu0 0.0
    %585 = vmatprep.subr.mxu0 0.0
    %586 = vmatpush1.msra.mxu0 0.0
    %587 = vmatprep.subr.mxu0 0.0
    %588 = vmatpush1.msra.mxu0 0.0
    %589 = vmatprep.mubr.f32.mxu0 0.0
    %590 = vmatmul.mubr.f32.gmra.mrb[0].mxu0 %v524
    %v591 = vpop.f32.mrb[0].mxu0
    %v592 = vadd.f32 0.0, %v591
    %v593 = vpop.f32.mrb[0].mxu0
    %594 = vdwg.mxu0
    %v595 = vadd.f32 %v413, %v592
    %v597 = vlaneseq
    %v598 = vshrl.u32 %v597, 7
    %v599 = vsub.s32 0, %v598
    %v600 = vrot.slane %v447, %v599
    %v602 = vadd.f32 %v595, %v600
    %v603 = vmax.f32 %v602, 0.0
    %v604 = vld [vmem:[#allocation13] sm:$0xff]
    %v605 = vld [vmem:[#allocation13 + $0x8] sm:$0xff]
    %v606 = vld [vmem:[#allocation13 + $0x10] sm:$0xff]
    %v607 = vld [vmem:[#allocation13 + $0x18] sm:$0xff]
    %v608 = vld [vmem:[#allocation13 + $0x20] sm:$0xff]
    %v609 = vld [vmem:[#allocation13 + $0x28] sm:$0xff]
    %v610 = vld [vmem:[#allocation13 + $0x30] sm:$0xff]
    %v611 = vld [vmem:[#allocation13 + $0x38] sm:$0xff]
    %v612 = vld [vmem:[#allocation13 + $0x40] sm:$0xff]
    %v613 = vld [vmem:[#allocation13 + $0x48] sm:$0xff]
    %v614 = vld [vmem:[#allocation13 + $0x50] sm:$0xff]
    %v615 = vld [vmem:[#allocation13 + $0x58] sm:$0xff]
    %v616 = vld [vmem:[#allocation13 + $0x60] sm:$0xff]
    %v617 = vld [vmem:[#allocation13 + $0x68] sm:$0xff]
    %v618 = vld [vmem:[#allocation13 + $0x70] sm:$0xff]
    %v619 = vld [vmem:[#allocation13 + $0x78] sm:$0xff]
    %v620 = vld [vmem:[%s12] sm:$0x1]
    %v622 = vlaneseq
    %v623 = vshrl.u32 %v622, 7
    %v624 = vsub.s32 0, %v623
    %v625 = vrot.slane %v620, %v624
    %627 = vmatprep.subr.mxu0 0.0
    %628 = vmatpush1.msra.mxu0 %v604
    %629 = vmatprep.subr.mxu0 0.0
    %630 = vmatpush1.msra.mxu0 %v605
    %631 = vmatprep.subr.mxu0 0.0
    %632 = vmatpush1.msra.mxu0 %v606
    %633 = vmatprep.subr.mxu0 0.0
    %634 = vmatpush1.msra.mxu0 %v607
    %635 = vmatprep.subr.mxu0 0.0
    %636 = vmatpush1.msra.mxu0 %v608
    %637 = vmatprep.subr.mxu0 0.0
    %638 = vmatpush1.msra.mxu0 %v609
    %639 = vmatprep.subr.mxu0 0.0
    %640 = vmatpush1.msra.mxu0 %v610
    %641 = vmatprep.subr.mxu0 0.0
    %642 = vmatpush1.msra.mxu0 %v611
    %643 = vmatprep.subr.mxu0 0.0
    %644 = vmatpush1.msra.mxu0 %v612
    %645 = vmatprep.subr.mxu0 0.0
    %646 = vmatpush1.msra.mxu0 %v613
    %647 = vmatprep.subr.mxu0 0.0
    %648 = vmatpush1.msra.mxu0 %v614
    %649 = vmatprep.subr.mxu0 0.0
    %650 = vmatpush1.msra.mxu0 %v615
    %651 = vmatprep.subr.mxu0 0.0
    %652 = vmatpush1.msra.mxu0 %v616
    %653 = vmatprep.subr.mxu0 0.0
    %654 = vmatpush1.msra.mxu0 %v617
    %655 = vmatprep.subr.mxu0 0.0
    %656 = vmatpush1.msra.mxu0 %v618
    %657 = vmatprep.subr.mxu0 0.0
    %658 = vmatpush1.msra.mxu0 %v619
    %659 = vmatprep.subr.mxu0 0.0
    %660 = vmatpush1.msra.mxu0 0.0
    %661 = vmatprep.subr.mxu0 0.0
    %662 = vmatpush1.msra.mxu0 0.0
    %663 = vmatprep.subr.mxu0 0.0
    %664 = vmatpush1.msra.mxu0 0.0
    %665 = vmatprep.subr.mxu0 0.0
    %666 = vmatpush1.msra.mxu0 0.0
    %667 = vmatprep.subr.mxu0 0.0
    %668 = vmatpush1.msra.mxu0 0.0
    %669 = vmatprep.subr.mxu0 0.0
    %670 = vmatpush1.msra.mxu0 0.0
    %671 = vmatprep.subr.mxu0 0.0
    %672 = vmatpush1.msra.mxu0 0.0
    %673 = vmatprep.subr.mxu0 0.0
    %674 = vmatpush1.msra.mxu0 0.0
    %675 = vmatprep.subr.mxu0 0.0
    %676 = vmatpush1.msra.mxu0 0.0
    %677 = vmatprep.subr.mxu0 0.0
    %678 = vmatpush1.msra.mxu0 0.0
    %679 = vmatprep.subr.mxu0 0.0
    %680 = vmatpush1.msra.mxu0 0.0
    %681 = vmatprep.subr.mxu0 0.0
    %682 = vmatpush1.msra.mxu0 0.0
    %683 = vmatprep.subr.mxu0 0.0
    %684 = vmatpush1.msra.mxu0 0.0
    %685 = vmatprep.subr.mxu0 0.0
    %686 = vmatpush1.msra.mxu0 0.0
    %687 = vmatprep.subr.mxu0 0.0
    %688 = vmatpush1.msra.mxu0 0.0
    %689 = vmatprep.subr.mxu0 0.0
    %690 = vmatpush1.msra.mxu0 0.0
    %691 = vmatprep.mubr.f32.mxu0 0.0
    %692 = vmatmul.mubr.f32.gmra.mrb[0].mxu0 %v603
    %v693 = vpop.f32.mrb[0].mxu0
    %v694 = vadd.f32 %v625, %v693
    %v695 = vpop.f32.mrb[0].mxu0
    %696 = vdwg.mxu0
    %697 = vst [vmem:[#allocation14] sm:$0xff] %v694
    // Predicated region
    $region82: #{tpu_custom_call.1} parent=1 // pred_check
      _
    $region83: #{tpu_custom_call.1} parent=1 // pred_check_branch
      %699 = sbr.rel (0) target = $region85
    $region84: #{tpu_custom_call.1} parent=1 // pred_region
      %s701 = ssub.s32 128, 128
      %702 = vsyncadd [#allocation4], %s701
      %s704 = sshll.u32 [#allocation14], 4
      %s705 = int_to_ptr.vmem [resolvable:$true] %s704
      %707 = dma.vmem_to_hbm [thread:$0]  %s705, 128, %s13, [#allocation4]
    $region85: #{tpu_custom_call.1} parent=1 // pred_fallthru
      _
    // Predicated region
    $region86: #{tpu_custom_call.1} parent=1 // pred_check
      _
    $region87: #{tpu_custom_call.1} parent=1 // pred_check_branch
      %709 = sbr.rel (0) target = $region89
    $region88: #{tpu_custom_call.1} parent=1 // pred_region
      %710 = dma.done [#allocation4], 128
    $region89: #{tpu_custom_call.1} parent=1 // pred_fallthru
      _
    %711 = vsyncpa [#allocation3], 1
    %712 = vsyncpa [#allocation6], 1
    %713 = vsyncpa [#allocation9], 1
    %714 = vsyncpa [#allocation12], 1
    %715 = vsyncpa [#allocation4], 1

</llo_original>
